<compile_context>
chip_gen: v7x
topology: tpu7x:2x2x1
jax: 0.10.0
libtpu: 0.0.40
codegen_flags: <defaults>
</compile_context>

<pallas_src>
import functools

import jax
import jax.numpy as jnp
from jax.experimental import pallas as pl
from jax.experimental.pallas import tpu as pltpu


def _nll_kernel(logits_ref, labels_ref, out_ref, acc_ref, *, n_rows, tm):
    """Accumulate per-row logits[i, labels[i]] over row tiles; finalize -(1/N)*sum.

    logits_ref: (tm, C)   native-dtype log-probs (VMEM tile, double-buffered)
    labels_ref: (tm, 1)   int32 class indices    (VMEM tile, double-buffered)
    out_ref:    (8, 128)  f32 broadcast scalar loss (written at finalize only)
    acc_ref:    (tm, 1)   f32 VMEM per-row running accumulator (persists over grid)
    """
    s = pl.program_id(0)
    n_steps = pl.num_programs(0)

    @pl.when(s == 0)
    def _init():
        acc_ref[...] = jnp.zeros_like(acc_ref)

    logits = logits_ref[...]          # (tm, c) native dtype
    labels = labels_ref[...]          # (tm, 1) int32
    c = logits.shape[1]

    # Global row ids of this tile -> mask ragged rows of the last block.
    row_ids = s * tm + jax.lax.broadcasted_iota(jnp.int32, (tm, 1), 0)
    valid_row = row_ids < n_rows                     # (tm, 1) bool
    safe_labels = jnp.where(valid_row, labels, -1)   # invalid rows match no class

    # Select (not multiply-by-onehot): avoids 0 * -inf = NaN and any garbage in
    # the padded rows of a ragged last block.
    class_ids = jax.lax.broadcasted_iota(jnp.int32, (tm, c), 1)
    picked = jnp.where(class_ids == safe_labels, logits, jnp.zeros_like(logits))

    # Exact in native dtype: at most one nonzero term per row.  Only the (tm, 1)
    # partials are widened to f32 before accumulation (VPU adds, no SMEM scalar
    # round trip, no per-step scalar serialization).
    row_vals = jnp.sum(picked, axis=1, keepdims=True)
    acc_ref[...] += row_vals.astype(jnp.float32)

    @pl.when(s == n_steps - 1)
    def _finalize():
        total = jnp.sum(acc_ref[...])                # single XLU reduce, once
        loss = -total * jnp.float32(1.0 / n_rows)    # true batch size N
        out_ref[...] = jnp.broadcast_to(loss, out_ref.shape)


def nll_loss_pallas(
    logits: jax.Array,
    labels: jax.Array,
    *,
    target_tile_bytes: int = 4 * 1024 * 1024,
    max_rows_per_block: int | None = None,
) -> jax.Array:
    """Equivalent of F.nll_loss(logits, labels) with reduction='mean'.

    logits: (N, C) log-probabilities (any float dtype; streamed in native dtype)
    labels: (N,)   integer class indices
    returns: scalar float32
    """
    assert logits.ndim == 2, "this kernel implements the (N, C) nll_loss case"
    n, c = logits.shape
    labels_2d = labels.astype(jnp.int32).reshape(n, 1)

    itemsize = jnp.dtype(logits.dtype).itemsize
    c_pad = ((c + 127) // 128) * 128          # VMEM lane-pads the class axis
    n_pad8 = ((n + 7) // 8) * 8

    # --- generation-aware VMEM budget -------------------------------------------
    try:
        vmem_cap = int(pltpu.get_tpu_info().vmem_capacity_bytes)
    except Exception:
        vmem_cap = 64 * 1024 * 1024           # conservative (v7x-sized) fallback
    budget = min(32 << 20, max(8 << 20, (vmem_cap - (16 << 20)) // 2))

    # VMEM bytes per tile-row: double-buffered logits + double-buffered labels
    # (a (tm,1) i32 tile lane-pads to 512 B/row) + f32 per-row accumulator.
    per_row_vmem = 2 * c_pad * itemsize + 2 * 512 + 512
    tm_vmem = (budget // per_row_vmem) // 8 * 8
    tm_target = (target_tile_bytes // max(c * itemsize, 1)) // 8 * 8
    tm = max(8, min(tm_vmem, tm_target, n_pad8))
    if max_rows_per_block is not None:
        tm = max(8, min(tm, (max_rows_per_block // 8) * 8 or 8))

    num_blocks = pl.cdiv(n, tm)

    # Scoped VMEM limit from actual usage (+ headroom for Mosaic internal scratch).
    need = (2 * tm * c_pad * itemsize   # double-buffered logits tile
            + 2 * tm * 512              # double-buffered labels tile (lane-padded)
            + tm * 512                  # f32 accumulator
            + 2 * 8 * 128 * 4           # output block
            + (2 << 20))                # headroom / internal scratch
    vmem_limit = int(max(16 << 20, min(need, vmem_cap - (8 << 20))))

    kernel = functools.partial(_nll_kernel, n_rows=n, tm=tm)

    out = pl.pallas_call(
        kernel,
        out_shape=jax.ShapeDtypeStruct((8, 128), jnp.float32),
        grid=(num_blocks,),
        in_specs=[
            pl.BlockSpec((tm, c), lambda s: (s, 0)),
            pl.BlockSpec((tm, 1), lambda s: (s, 0)),
        ],
        out_specs=pl.BlockSpec((8, 128), lambda s: (0, 0)),
        scratch_shapes=[pltpu.VMEM((tm, 1), jnp.float32)],
        compiler_params=pltpu.CompilerParams(
            dimension_semantics=("arbitrary",),
            vmem_limit_bytes=vmem_limit,
        ),
        cost_estimate=pl.CostEstimate(
            flops=2 * n * c,
            transcendentals=0,
            bytes_accessed=int(n * c * itemsize + n * 4 + 8 * 128 * 4),
        ),
    )(logits, labels_2d)

    return out[0, 0]


if __name__ == "__main__":
    key = jax.random.PRNGKey(0)
    k1, k2, k3, k4, k5, k6 = jax.random.split(key, 6)

    # Case 1: tiny single-block path (N=8, C=32 classification head), f32.
    N1, C1 = 8, 32
    logits1 = jax.nn.log_softmax(jax.random.normal(k1, (N1, C1), jnp.float32), axis=-1)
    labels1 = jax.random.randint(k2, (N1,), 0, C1, dtype=jnp.int32)
    loss1 = jax.block_until_ready(nll_loss_pallas(logits1, labels1))
    ref1 = -jnp.mean(logits1[jnp.arange(N1), labels1])
    assert jnp.allclose(loss1, ref1, atol=1e-5, rtol=1e-5), (loss1, ref1)

    # Case 2: forces the multi-step tiled path with a ragged last block
    # (N=20 over 8-row tiles -> 3 grid steps, last block half-empty).
    N2, C2 = 20, 32
    logits2 = jax.nn.log_softmax(jax.random.normal(k3, (N2, C2), jnp.float32), axis=-1)
    labels2 = jax.random.randint(k4, (N2,), 0, C2, dtype=jnp.int32)
    loss2 = jax.block_until_ready(
        nll_loss_pallas(logits2, labels2, max_rows_per_block=8)
    )
    ref2 = -jnp.mean(logits2[jnp.arange(N2), labels2])
    assert jnp.allclose(loss2, ref2, atol=1e-5, rtol=1e-5), (loss2, ref2)

    # Case 3: bf16 logits streamed in native dtype, C not a multiple of 128.
    N3, C3 = 16, 160
    logits3 = jax.nn.log_softmax(
        jax.random.normal(k5, (N3, C3), jnp.float32), axis=-1
    ).astype(jnp.bfloat16)
    labels3 = jax.random.randint(k6, (N3,), 0, C3, dtype=jnp.int32)
    loss3 = jax.block_until_ready(
        nll_loss_pallas(logits3, labels3, max_rows_per_block=8)
    )
    ref3 = -jnp.mean(logits3.astype(jnp.float32)[jnp.arange(N3), labels3])
    assert jnp.allclose(loss3, ref3, atol=1e-5, rtol=1e-5), (loss3, ref3)

    print("KERNEL_OK")
</pallas_src>

<mosaic_0001>
module attributes {stable_mosaic.version = 11 : i64} {
  func.func @_nll_kernel(%arg0: i32, %arg1: memref<8x32xf32, #tpu.memory_space<vmem>>, %arg2: memref<8x1xi32, #tpu.memory_space<vmem>>, %arg3: memref<8x128xf32, #tpu.memory_space<vmem>>, %arg4: memref<8x1xf32, #tpu.memory_space<vmem>>) attributes {dimension_semantics = [#tpu.dimension_semantics<arbitrary>], iteration_bounds = array<i64: 1>, scalar_prefetch = 0 : i64, scratch_operands = 1 : i64, tpu.core_type = #tpu.core_type<tc>, window_params = [{transform_indices = @transform_0, window_bounds = array<i64: 8, 32>}, {transform_indices = @transform_1, window_bounds = array<i64: 8, 1>}, {pipeline_mode = #tpu.pipeline_mode<synchronous>, transform_indices = @transform_2, window_bounds = array<i64: 8, 128>}]} {
    %c0_i32 = arith.constant 0 : i32
    %0 = arith.cmpi eq, %arg0, %c0_i32 : i32
    %1 = arith.extui %0 : i1 to i32
    %c0_i32_0 = arith.constant 0 : i32
    %2 = arith.cmpi ne, %1, %c0_i32_0 : i32
    scf.if %2 {
      %cst_12 = arith.constant 0.000000e+00 : f32
      %26 = vector.broadcast %cst_12 : f32 to vector<8x1xf32>
      %c0_13 = arith.constant 0 : index
      %c0_14 = arith.constant 0 : index
      %27 = vector.load %arg4[%c0_13, %c0_14] : memref<8x1xf32, #tpu.memory_space<vmem>>, vector<8x1xf32>
      tpu.vector_store %arg4[%c0_13, %c0_14], %26 {strides = array<i32>} : memref<8x1xf32, #tpu.memory_space<vmem>>, vector<8x1xf32>,
    } else {
    }
    %c0 = arith.constant 0 : index
    %c0_1 = arith.constant 0 : index
    %3 = vector.load %arg1[%c0, %c0_1] : memref<8x32xf32, #tpu.memory_space<vmem>>, vector<8x32xf32>
    %c0_2 = arith.constant 0 : index
    %c0_3 = arith.constant 0 : index
    %4 = vector.load %arg2[%c0_2, %c0_3] : memref<8x1xi32, #tpu.memory_space<vmem>>, vector<8x1xi32>
    %c8_i32 = arith.constant 8 : i32
    %5 = arith.muli %arg0, %c8_i32 : i32
    %6 = tpu.iota {dimensions = array<i32: 0>} : vector<8x1xi32>
    %7 = vector.broadcast %5 : i32 to vector<8x1xi32>
    %8 = arith.addi %7, %6 : vector<8x1xi32>
    %c8_i32_4 = arith.constant 8 : i32
    %9 = vector.broadcast %c8_i32_4 : i32 to vector<8x1xi32>
    %10 = arith.cmpi slt, %8, %9 : vector<8x1xi32>
    %c-1_i32 = arith.constant -1 : i32
    %11 = vector.broadcast %c-1_i32 : i32 to vector<8x1xi32>
    %12 = arith.select %10, %4, %11 : vector<8x1xi1>, vector<8x1xi32>
    %13 = tpu.iota {dimensions = array<i32: 1>} : vector<8x32xi32>
    %14 = vector.broadcast %12 : vector<8x1xi32> to vector<8x32xi32>
    %15 = arith.cmpi eq, %13, %14 : vector<8x32xi32>
    %cst = arith.constant 0.000000e+00 : f32
    %16 = vector.broadcast %cst : f32 to vector<8x32xf32>
    %17 = arith.select %15, %3, %16 : vector<8x32xi1>, vector<8x32xf32>
    %cst_5 = arith.constant dense<0.000000e+00> : vector<8xf32>
    %18 = vector.multi_reduction <add>, %17, %cst_5 [1] : vector<8x32xf32> to vector<8xf32>
    %19 = vector.shape_cast %18 : vector<8xf32> to vector<8x1xf32>
    %c0_6 = arith.constant 0 : index
    %c0_7 = arith.constant 0 : index
    %20 = vector.load %arg4[%c0_6, %c0_7] : memref<8x1xf32, #tpu.memory_space<vmem>>, vector<8x1xf32>
    %21 = arith.addf %20, %19 : vector<8x1xf32>
    %c0_8 = arith.constant 0 : index
    %c0_9 = arith.constant 0 : index
    %22 = vector.load %arg4[%c0_8, %c0_9] : memref<8x1xf32, #tpu.memory_space<vmem>>, vector<8x1xf32>
    tpu.vector_store %arg4[%c0_8, %c0_9], %21 {strides = array<i32>} : memref<8x1xf32, #tpu.memory_space<vmem>>, vector<8x1xf32>,
    %c0_i32_10 = arith.constant 0 : i32
    %23 = arith.cmpi eq, %arg0, %c0_i32_10 : i32
    %24 = arith.extui %23 : i1 to i32
    %c0_i32_11 = arith.constant 0 : i32
    %25 = arith.cmpi ne, %24, %c0_i32_11 : i32
    scf.if %25 {
      %c0_12 = arith.constant 0 : index
      %c0_13 = arith.constant 0 : index
      %26 = vector.load %arg4[%c0_12, %c0_13] : memref<8x1xf32, #tpu.memory_space<vmem>>, vector<8x1xf32>
      %27 = vector.shape_cast %26 : vector<8x1xf32> to vector<1x8x1xf32>
      %cst_14 = arith.constant dense<0.000000e+00> : vector<1xf32>
      %28 = vector.multi_reduction <add>, %27, %cst_14 [1, 2] : vector<1x8x1xf32> to vector<1xf32>
      %29 = vector.shape_cast %28 : vector<1xf32> to vector<1x1x1xf32>
      %30 = vector.extract %29[0, 0, 0] : f32 from vector<1x1x1xf32>
      %cst_15 = arith.constant 0.000000e+00 : f32
      %31 = arith.subf %cst_15, %30 : f32
      %cst_16 = arith.constant 1.250000e-01 : f32
      %32 = arith.mulf %31, %cst_16 : f32
      %33 = vector.broadcast %32 : f32 to vector<8x128xf32>
      %c0_17 = arith.constant 0 : index
      %c0_18 = arith.constant 0 : index
      %34 = vector.load %arg3[%c0_17, %c0_18] : memref<8x128xf32, #tpu.memory_space<vmem>>, vector<8x128xf32>
      tpu.vector_store %arg3[%c0_17, %c0_18], %33 {strides = array<i32>} : memref<8x128xf32, #tpu.memory_space<vmem>>, vector<8x128xf32>,
    } else {
    }
    return
  }
  func.func @transform_0(%arg0: i32) -> (i32, i32) {
    %c0_i32 = arith.constant 0 : i32
    %c0_i32_0 = arith.constant 0 : i32
    return %arg0, %c0_i32 : i32, i32
  }
  func.func @transform_1(%arg0: i32) -> (i32, i32) {
    %c0_i32 = arith.constant 0 : i32
    %c0_i32_0 = arith.constant 0 : i32
    return %arg0, %c0_i32 : i32, i32
  }
  func.func @transform_2(%arg0: i32) -> (i32, i32) {
    %c0_i32 = arith.constant 0 : i32
    %c0_i32_0 = arith.constant 0 : i32
    %c0_i32_1 = arith.constant 0 : i32
    return %c0_i32, %c0_i32_0 : i32, i32
  }
}

</mosaic_0001>

<llo_original>
// kernel: tpu_custom_call.1
$region0: #{tpu_custom_call.1}
  #allocation0 [shape = 'u32[]', space=smem, size = 0x4, offset = 0x4, fixed_abs, tag = 'smem constant byte address 0x4 - core index']
  #allocation1 [shape = 'u32[144,128]{1,0:T(1,128)}', space=vmem, size = 0x12000, scoped, tag = 'internal scratch']
  #allocation2 [shape = 'f32[8,1]{1,0:T(8,128)}', space=vmem, size = 0x1000, scoped, tag = 'scratch operand']
  %s0 = inlined_call_operand.vmem [shape: f32[8,32], index: 0, kind: input, shape index: {}]
  %s1 = inlined_call_operand.vmem [shape: s32[8,1], index: 1, kind: input, shape index: {}]
  %s2 = inlined_call_operand.hbm [shape: f32[8,128], index: 2, kind: output, shape index: {}]
  %s3 = sld [smem:[#allocation0]]
  $region26: #{tpu_custom_call.1} parent=0
    _
  %s5 = ssub.s32 1, %s3
  %s6 = scalar_select 0, %s5, %s3
  $region1: #{tpu_custom_call.1} parent=0
    #allocation3 [shape = 'u8[4096]{0}', space=vmem, size = 0x1000, scoped, tag = 'output window, operand 0, single buffered']
    #allocation4 [shape = 's32[1]{0}', space=sflag, size = 0x4, scoped, tag = 'scoped memory for tpu_custom_call.1']
    %7 = vsyncpa [#allocation4], 0
    // Predicated region
    $region2: #{tpu_custom_call.1} parent=1 // pred_check
      _
    $region3: #{tpu_custom_call.1} parent=1 // pred_check_branch
      %9 = sbr.rel (0) target = $region5
    $region4: #{tpu_custom_call.1} parent=1 // pred_region
      _
    $region5: #{tpu_custom_call.1} parent=1 // pred_fallthru
      _
    // Predicated region
    $region6: #{tpu_custom_call.1} parent=1 // pred_check
      _
    $region7: #{tpu_custom_call.1} parent=1 // pred_check_branch
      %11 = sbr.rel (0) target = $region9
    $region8: #{tpu_custom_call.1} parent=1 // pred_region
      _
    $region9: #{tpu_custom_call.1} parent=1 // pred_fallthru
      _
    %p12 = scmp.eq.s32.totalorder 0, 0
    // Predicated region
    $region10: #{tpu_custom_call.1} parent=1 // pred_check
      %p13 = pneg %p12
    $region11: #{tpu_custom_call.1} parent=1 // pred_check_branch
      %15 = sbr.rel (%p13) target = $region13
    $region12: #{tpu_custom_call.1} parent=1 // pred_region
      %vm16 = vcmask 7168
      %17 = vst.msk [vmem:[#allocation2] sm:$0xff] %vm16, 0.0
    $region13: #{tpu_custom_call.1} parent=1 // pred_fallthru
      _
    %v18 = vld [vmem:[%s0] sm:$0xff]
    %v19 = vld [vmem:[%s1] sm:$0xff]
    %s20 = smul.u32 0, 8
    %v21 = vlaneseq
    %v22 = vshrl.u32 %v21, 7
    %v23 = vstv %s20
    %v24 = vadd.s32 %v23, %v22
    %vm25 = vcmp.lt.s32.totalorder %v24, 8
    %v26 = vsel %vm25, %v19, 4294967295
    %v27 = vlaneseq
    %v28 = vand.u32 %v27, 127
    %29 = vset.pattern.permute.xlu0 0
    %30 = vperm.xlu0 %29, %v26
    %v31 = vpop.permute.xlu0 %30
    %vm32 = vcmp.eq.s32.totalorder %v28, %v31
    %v33 = vsel %vm32, %v18, 0.0
    %vm34 = vcmask 261120
    %v35 = vsel %vm34, %v33, 0.0
    %36 = vadd.xlane.f32.xlu0 %v35
    %v37 = vpop.xlane.xlu0 %36
    %v38 = vld [vmem:[#allocation2] sm:$0xff]
    %v39 = vadd.f32 %v38, %v37
    %vm40 = vcmask 7168
    %41 = vst.msk [vmem:[#allocation2] sm:$0xff] %vm40, %v39
    // Predicated region
    $region14: #{tpu_custom_call.1} parent=1 // pred_check
      %p42 = pneg %p12
    $region15: #{tpu_custom_call.1} parent=1 // pred_check_branch
      %44 = sbr.rel (%p42) target = $region17
    $region16: #{tpu_custom_call.1} parent=1 // pred_region
      %v45 = vld [vmem:[#allocation2] sm:$0xff]
      %v46 = vsel %vm40, %v45, 0.0
      %47 = vadd.xlane.f32.xlu0 %v46
      %v48 = vpop.xlane.xlu0 %47
      %v49 = vrot.slane %v48, 4
      %v50 = vadd.f32 %v48, %v49
      %v51 = vrot.slane %v50, 2
      %v52 = vadd.f32 %v50, %v51
      %v53 = vrot.slane %v52, 1
      %v54 = vadd.f32 %v52, %v53
      %s55 = vtos %v54
      %s56 = ssub.f32 0.0, %s55
      %s57 = smul.f32 %s56, 0.125
      %v58 = vstv %s57
      %59 = vst [vmem:[#allocation3] sm:$0xff] %v58
    $region17: #{tpu_custom_call.1} parent=1 // pred_fallthru
      _
    // Predicated region
    $region18: #{tpu_custom_call.1} parent=1 // pred_check
      _
    $region19: #{tpu_custom_call.1} parent=1 // pred_check_branch
      %61 = sbr.rel (0) target = $region21
    $region20: #{tpu_custom_call.1} parent=1 // pred_region
      %s63 = ssub.s32 128, 128
      %64 = vsyncadd [#allocation4], %s63
      %s66 = sshll.u32 [#allocation3], 4
      %s67 = int_to_ptr.vmem [resolvable:$true] %s66
      %69 = dma.vmem_to_hbm [thread:$0]  %s67, 128, %s2, [#allocation4]
    $region21: #{tpu_custom_call.1} parent=1 // pred_fallthru
      _
    // Predicated region
    $region22: #{tpu_custom_call.1} parent=1 // pred_check
      _
    $region23: #{tpu_custom_call.1} parent=1 // pred_check_branch
      %71 = sbr.rel (0) target = $region25
    $region24: #{tpu_custom_call.1} parent=1 // pred_region
      %72 = dma.done [#allocation4], 128
    $region25: #{tpu_custom_call.1} parent=1 // pred_fallthru
      _
    %73 = vsyncpa [#allocation4], 1

</llo_original>
